<compile_context>
chip_gen: v6e
topology: v6e:2x2x1
jax: 0.10.0
libtpu: 0.0.40
codegen_flags: <defaults>
</compile_context>

<pallas_src>
import math

import jax
import jax.numpy as jnp
from jax.experimental import pallas as pl
from jax.experimental.pallas import tpu as pltpu

HARD_LIMIT = 3.0
LANES = 128


def _actnorm_kernel(x_ref, bias_ref, exp_s_ref, y_ref):
    # x_ref: (TB, TW) tile; bias_ref / exp_s_ref: (1, TW) parameter rows.
    y_ref[...] = ((x_ref[...] + bias_ref[...]) * exp_s_ref[...]).astype(y_ref.dtype)


def _choose_tile_cols(W):
    """Lane-dim tile: full width unless very wide and cleanly divisible."""
    if W <= 2048:
        return W
    for tw in (2048, 1536, 1024, 512, 256, 128):
        if W % tw == 0:
            return tw
    return W  # non-128-multiple widths must use the full extent (masked mode)


def _choose_tile_rows(rows, row_bytes, target_bytes=2 * 1024 * 1024):
    """Batch tile: multiple of 8 (or full extent), ~2 MiB, >=2 grid steps."""
    if rows <= 8:
        return rows
    tb = max(8, target_bytes // max(row_bytes, 1))
    tb = min(tb, rows)
    tb = (tb // 8) * 8
    if rows >= 16:
        # keep at least 2 batch grid steps so v7x can shard across its 2 TCs
        half = (((rows + 1) // 2) + 7) // 8 * 8
        tb = min(tb, half)
    return max(tb, 8)


def actnorm_forward(x, ldj, bias, scales, *, donate_x=False, min_kernel_bytes=64 * 1024):
    """ActNormFlow.forward — x: (B, V), ldj: (B,), bias/scales: (V,)."""
    B, V = x.shape
    itemsize = jnp.dtype(x.dtype).itemsize

    # ---- hoisted parameter math (once, in the wrapper) ---------------------
    s = jnp.clip(scales.astype(jnp.float32), -HARD_LIMIT, HARD_LIMIT)
    ldj_out = ldj - jnp.sum(s)                      # scalar subtract, fused by XLA
    exp_s = jnp.exp(s).astype(x.dtype)              # packed compute when x is bf16
    bias_c = bias.astype(x.dtype)

    # ---- tiny-input bypass: pallas_call fixed cost would dominate ----------
    if B * V * itemsize < min_kernel_bytes:
        y = (x + bias_c[None]) * exp_s[None]
        return y, ldj_out

    # ---- lane-dense layout (never pad/slice through HBM) -------------------
    fold = 1
    if V % LANES == 0:
        rows, W = B, V
        x2 = x
    else:
        lcm_w = (V * LANES) // math.gcd(V, LANES)
        f = lcm_w // V
        if f > 1 and B % f == 0:
            fold = f
            rows, W = B // fold, lcm_w
            x2 = x.reshape(rows, W)                 # free, row-major contiguous
        else:
            # masked fallback: full-width blocks, partial lane stores in-kernel
            rows, W = B, V
            x2 = x

    bias_row = (jnp.tile(bias_c, fold) if fold > 1 else bias_c).reshape(1, W)
    exp_row = (jnp.tile(exp_s, fold) if fold > 1 else exp_s).reshape(1, W)

    # ---- tile sizes & explicit VMEM budget ----------------------------------
    TW = _choose_tile_cols(W)
    TB = _choose_tile_rows(rows, TW * itemsize)
    grid = (pl.cdiv(rows, TB), pl.cdiv(W, TW))

    tile_bytes = TB * TW * itemsize
    vmem_budget = 2 * 2 * tile_bytes + 2 * 2 * TW * itemsize   # x/y + 2 param rows, dbl-buffered
    vmem_limit = min(max(int(vmem_budget * 1.5) + (1 << 20), 4 << 20), 32 << 20)

    # ---- batch x lane tiled, pipelined elementwise kernel -------------------
    y2 = pl.pallas_call(
        _actnorm_kernel,
        out_shape=jax.ShapeDtypeStruct((rows, W), x.dtype),
        grid=grid,
        in_specs=[
            pl.BlockSpec((TB, TW), lambda i, j: (i, j)),
            pl.BlockSpec((1, TW), lambda i, j: (0, j)),
            pl.BlockSpec((1, TW), lambda i, j: (0, j)),
        ],
        out_specs=pl.BlockSpec((TB, TW), lambda i, j: (i, j)),
        compiler_params=pltpu.CompilerParams(
            dimension_semantics=("parallel", "parallel"),
            vmem_limit_bytes=vmem_limit,
        ),
        input_output_aliases=({0: 0} if donate_x else {}),
    )(x2, bias_row, exp_row)

    # ---- undo layout plumbing (metadata-only reshape) ------------------------
    y = y2.reshape(B, V) if fold > 1 else y2
    return y, ldj_out


def actnorm_forward_ref(x, ldj, bias, scales):
    s = jnp.clip(scales[None], -HARD_LIMIT, HARD_LIMIT)
    t = bias[None]
    y = (x + t) * jnp.exp(s)
    return y, ldj - jnp.sum(s, axis=1)


def _check_case(name, B, V, key):
    kx, kl, kb, ks = jax.random.split(key, 4)
    x = jax.random.normal(kx, (B, V), dtype=jnp.float32)
    ldj = jax.random.normal(kl, (B,), dtype=jnp.float32)
    # Deterministic synthetic parameters (module __init__ uses zeros; nonzero
    # here so the kernel is exercised non-trivially, including the clamp).
    bias = 0.1 * jax.random.normal(kb, (V,), dtype=jnp.float32)
    scales = 2.0 * jax.random.normal(ks, (V,), dtype=jnp.float32)  # some exceed +-3

    y, ldj_out = actnorm_forward(x, ldj, bias, scales)
    jax.block_until_ready((y, ldj_out))

    y_ref, ldj_ref = actnorm_forward_ref(x, ldj, bias, scales)
    assert y.shape == y_ref.shape and ldj_out.shape == ldj_ref.shape, name
    assert jnp.allclose(y, y_ref, atol=1e-5, rtol=1e-5), name
    assert jnp.allclose(ldj_out, ldj_ref, atol=1e-5, rtol=1e-5), name


if __name__ == "__main__":
    key = jax.random.PRNGKey(0)
    # lcm-fold path: V=96 -> W=lcm(96,128)=384, fold=4 (lane-dense, no padding)
    _check_case("fold", B=1024, V=96, key=jax.random.fold_in(key, 1))
    # direct path: V multiple of 128
    _check_case("direct", B=256, V=128, key=jax.random.fold_in(key, 2))
    # masked full-width path: V=100, B not a multiple of fold=32
    _check_case("masked", B=200, V=100, key=jax.random.fold_in(key, 3))
    # tiny-input XLA bypass
    _check_case("bypass", B=8, V=32, key=jax.random.fold_in(key, 4))

    print("KERNEL_OK")
</pallas_src>

<mosaic_0001>
module attributes {stable_mosaic.version = 11 : i64} {
  func.func @_actnorm_kernel(%arg0: i32, %arg1: i32, %arg2: memref<128x384xf32, #tpu.memory_space<vmem>>, %arg3: memref<1x384xf32, #tpu.memory_space<vmem>>, %arg4: memref<1x384xf32, #tpu.memory_space<vmem>>, %arg5: memref<128x384xf32, #tpu.memory_space<vmem>>) attributes {dimension_semantics = [#tpu.dimension_semantics<parallel>, #tpu.dimension_semantics<parallel>], iteration_bounds = array<i64: 2, 1>, scalar_prefetch = 0 : i64, scratch_operands = 0 : i64, tpu.core_type = #tpu.core_type<tc>, window_params = [{transform_indices = @transform_0, window_bounds = array<i64: 128, 384>}, {transform_indices = @transform_1, window_bounds = array<i64: 1, 384>}, {transform_indices = @transform_2, window_bounds = array<i64: 1, 384>}, {transform_indices = @transform_3, window_bounds = array<i64: 128, 384>}]} {
    %c0 = arith.constant 0 : index
    %c0_0 = arith.constant 0 : index
    %0 = vector.load %arg2[%c0, %c0_0] : memref<128x384xf32, #tpu.memory_space<vmem>>, vector<128x384xf32>
    %c0_1 = arith.constant 0 : index
    %c0_2 = arith.constant 0 : index
    %1 = vector.load %arg3[%c0_1, %c0_2] : memref<1x384xf32, #tpu.memory_space<vmem>>, vector<1x384xf32>
    %2 = vector.broadcast %1 : vector<1x384xf32> to vector<128x384xf32>
    %3 = arith.addf %0, %2 : vector<128x384xf32>
    %c0_3 = arith.constant 0 : index
    %c0_4 = arith.constant 0 : index
    %4 = vector.load %arg4[%c0_3, %c0_4] : memref<1x384xf32, #tpu.memory_space<vmem>>, vector<1x384xf32>
    %5 = vector.broadcast %4 : vector<1x384xf32> to vector<128x384xf32>
    %6 = arith.mulf %3, %5 : vector<128x384xf32>
    %c0_5 = arith.constant 0 : index
    %c0_6 = arith.constant 0 : index
    %7 = vector.load %arg5[%c0_5, %c0_6] : memref<128x384xf32, #tpu.memory_space<vmem>>, vector<128x384xf32>
    tpu.vector_store %arg5[%c0_5, %c0_6], %6 {strides = array<i32>} : memref<128x384xf32, #tpu.memory_space<vmem>>, vector<128x384xf32>,
    return
  }
  func.func @transform_0(%arg0: i32, %arg1: i32) -> (i32, i32) {
    %c0_i32 = arith.constant 0 : i32
    return %arg0, %arg1 : i32, i32
  }
  func.func @transform_1(%arg0: i32, %arg1: i32) -> (i32, i32) {
    %c0_i32 = arith.constant 0 : i32
    %c0_i32_0 = arith.constant 0 : i32
    return %c0_i32, %arg1 : i32, i32
  }
  func.func @transform_2(%arg0: i32, %arg1: i32) -> (i32, i32) {
    %c0_i32 = arith.constant 0 : i32
    %c0_i32_0 = arith.constant 0 : i32
    return %c0_i32, %arg1 : i32, i32
  }
  func.func @transform_3(%arg0: i32, %arg1: i32) -> (i32, i32) {
    %c0_i32 = arith.constant 0 : i32
    return %arg0, %arg1 : i32, i32
  }
}

</mosaic_0001>

<llo_original>
// kernel: tpu_custom_call.1
$region0: #{tpu_custom_call.1}
  #allocation0 [shape = 'u32[]', space=smem, size = 0x4, offset = 0x4, fixed_abs, tag = 'smem constant byte address 0x4 - core index']
  #allocation1 [shape = 'u32[144,128]{1,0:T(1,128)}', space=vmem, size = 0x12000, scoped, tag = 'internal scratch']
  %s0 = inlined_call_operand.hbm [shape: f32[256,384], index: 0, kind: input, shape index: {}]
  %s1 = inlined_call_operand.hbm [shape: f32[1,384], index: 1, kind: input, shape index: {}]
  %s2 = inlined_call_operand.vmem [shape: f32[1,384], index: 2, kind: input, shape index: {}]
  %s3 = inlined_call_operand.hbm [shape: f32[256,384], index: 3, kind: output, shape index: {}]
  %s4 = sld [smem:[#allocation0]]
  $region53: #{tpu_custom_call.1} parent=0
    _
  %s6 = ssub.s32 1, %s4
  %s7 = scalar_select 0, %s6, %s4
  $region1: #{tpu_custom_call.1} parent=0
    #allocation2 [shape = 'u8[393216]{0}', space=vmem, size = 0x60000, scoped, tag = 'input window, operand 0']
    #allocation3 [shape = 's32[2]{0}', space=sflag, size = 0x8, scoped, tag = 'scoped memory for tpu_custom_call.1']
    #allocation4 [shape = 's32[2]{0}', space=sflag, size = 0x8, scoped, tag = 'scoped memory for tpu_custom_call.1']
    #allocation5 [shape = 'u8[1536]{0}', space=vmem, size = 0x800, scoped, tag = 'input window, operand 1, single buffered']
    #allocation6 [shape = 's32[1]{0}', space=sflag, size = 0x4, scoped, tag = 'scoped memory for tpu_custom_call.1']
    #allocation7 [shape = 'u8[393216]{0}', space=vmem, size = 0x60000, scoped, tag = 'output window, operand 0']
    %8 = vsyncpa [#allocation3], 0
    %s9 = scalar_lea.sflag [#allocation3], 1
    %10 = vsyncpa %s9, 0
    %11 = vsyncpa [#allocation6], 0
    %12 = vsyncpa [#allocation4], 0
    %s13 = scalar_lea.sflag [#allocation4], 1
    %14 = vsyncpa %s13, 0
    loop: start=0, step=1, limit=4
    $region2: #{tpu_custom_call.1} parent=1 // loop_pre_header
      _
    $region3: #{tpu_custom_call.1} parent=1 // loop_header
      %s16 = sphi 0, %s20
      %p17 = scmp.ge.s32.totalorder %s16, 4
      %s23 = sphi 0, %s35
      %s24 = sphi 0, %s31
      %s25 = sphi 0, %s23
      %s26 = sphi 0, %s24
      %s27 = sphi 0, %s25
      %s28 = sphi 0, %s26
      %s40 = sphi 0, %s42
      %s43 = sphi 0, %s40
      %s44 = sphi 0, %s43
      %s60 = sphi 0, %s44
      %s66 = sphi 0, %s68
      %s69 = sphi 0, %s66
      %s70 = sphi 0, %s69
      %s86 = sphi 0, %s70
      %s92 = sphi 0, %s94
      %s95 = sphi 0, %s92
      %s96 = sphi 0, %s95
      %s112 = sphi 0, %s96
      %s120 = sphi 0, %s122
      %s123 = sphi 0, %s120
      %s124 = sphi 0, %s123
      %s140 = sphi 0, %s124
    $region4: #{tpu_custom_call.1} parent=1 // loop_header_branch
      %19 = sbr.rel (%p17) target = $region8
    $region5: #{tpu_custom_call.1} parent=1 // loop_body
      %s21 = ssub.s32 %s16, 1
      %s22 = ssub.s32 %s16, 2
      %s29 = sadd.s32 1, %s24
      %p30 = scmp.ge.s32.totalorder %s29, 1
      %s31 = scalar_select %p30, 0, %s29
      %s32 = sadd.s32 1, %s23
      %s33 = scalar_select %p30, %s32, %s23
      %p34 = scmp.ge.s32.totalorder %s33, 2
      %s35 = scalar_select %p34, 0, %s33
      %s36 = ssub.s32 %s23, %s35
      %s37 = ssub.s32 %s24, %s31
      %s38 = sor.u32 %s36, %s37
      %p39 = scmp.eq.s32.totalorder %s38, 0
      %s41 = sadd.s32 %s40, 1
      %s42 = scalar_select %p39, %s40, %s41
      %p45 = pneg %p39
      %p46 = scmp.eq.s32.totalorder %s16, 1
      %p47 = por %p45, %p46
      %p48 = scmp.ne.s32.totalorder %s40, %s43
      %p49 = scmp.eq.s32.totalorder %s16, 0
      %p50 = por %p48, %p49
      %p51 = scmp.ne.s32.totalorder %s40, %s43
      %p52 = scmp.eq.s32.totalorder %s21, 1
      %p53 = por %p51, %p52
      %p54 = scmp.ne.s32.totalorder %s43, %s44
      %p55 = scmp.eq.s32.totalorder %s21, 0
      %p56 = por %p54, %p55
      %p57 = scmp.ne.s32.totalorder %s43, %s44
      %p58 = scmp.eq.s32.totalorder %s22, 1
      %p59 = por %p57, %p58
      %p61 = scmp.ne.s32.totalorder %s44, %s60
      %p62 = scmp.eq.s32.totalorder %s22, 0
      %p63 = por %p61, %p62
      %s64 = ssub.s32 %s24, %s31
      %p65 = scmp.eq.s32.totalorder %s64, 0
      %s67 = sadd.s32 %s66, 1
      %s68 = scalar_select %p65, %s66, %s67
      %p71 = pneg %p65
      %p72 = scmp.eq.s32.totalorder %s16, 1
      %p73 = por %p71, %p72
      %p74 = scmp.ne.s32.totalorder %s66, %s69
      %p75 = scmp.eq.s32.totalorder %s16, 0
      %p76 = por %p74, %p75
      %p77 = scmp.ne.s32.totalorder %s66, %s69
      %p78 = scmp.eq.s32.totalorder %s21, 1
      %p79 = por %p77, %p78
      %p80 = scmp.ne.s32.totalorder %s69, %s70
      %p81 = scmp.eq.s32.totalorder %s21, 0
      %p82 = por %p80, %p81
      %p83 = scmp.ne.s32.totalorder %s69, %s70
      %p84 = scmp.eq.s32.totalorder %s22, 1
      %p85 = por %p83, %p84
      %p87 = scmp.ne.s32.totalorder %s70, %s86
      %p88 = scmp.eq.s32.totalorder %s22, 0
      %p89 = por %p87, %p88
      %s90 = ssub.s32 %s24, %s31
      %p91 = scmp.eq.s32.totalorder %s90, 0
      %s93 = sadd.s32 %s92, 1
      %s94 = scalar_select %p91, %s92, %s93
      %p97 = pneg %p91
      %p98 = scmp.eq.s32.totalorder %s16, 1
      %p99 = por %p97, %p98
      %p100 = scmp.ne.s32.totalorder %s92, %s95
      %p101 = scmp.eq.s32.totalorder %s16, 0
      %p102 = por %p100, %p101
      %p103 = scmp.ne.s32.totalorder %s92, %s95
      %p104 = scmp.eq.s32.totalorder %s21, 1
      %p105 = por %p103, %p104
      %p106 = scmp.ne.s32.totalorder %s95, %s96
      %p107 = scmp.eq.s32.totalorder %s21, 0
      %p108 = por %p106, %p107
      %p109 = scmp.ne.s32.totalorder %s95, %s96
      %p110 = scmp.eq.s32.totalorder %s22, 1
      %p111 = por %p109, %p110
      %p113 = scmp.ne.s32.totalorder %s96, %s112
      %p114 = scmp.eq.s32.totalorder %s22, 0
      %p115 = por %p113, %p114
      %s116 = ssub.s32 %s23, %s35
      %s117 = ssub.s32 %s24, %s31
      %s118 = sor.u32 %s116, %s117
      %p119 = scmp.eq.s32.totalorder %s118, 0
      %s121 = sadd.s32 %s120, 1
      %s122 = scalar_select %p119, %s120, %s121
      %p125 = pneg %p119
      %p126 = scmp.eq.s32.totalorder %s16, 1
      %p127 = por %p125, %p126
      %p128 = scmp.ne.s32.totalorder %s120, %s123
      %p129 = scmp.eq.s32.totalorder %s16, 0
      %p130 = por %p128, %p129
      %p131 = scmp.ne.s32.totalorder %s120, %s123
      %p132 = scmp.eq.s32.totalorder %s21, 1
      %p133 = por %p131, %p132
      %p134 = scmp.ne.s32.totalorder %s123, %s124
      %p135 = scmp.eq.s32.totalorder %s21, 0
      %p136 = por %p134, %p135
      %p137 = scmp.ne.s32.totalorder %s123, %s124
      %p138 = scmp.eq.s32.totalorder %s22, 1
      %p139 = por %p137, %p138
      %p141 = scmp.ne.s32.totalorder %s124, %s140
      %p142 = scmp.eq.s32.totalorder %s22, 0
      %p143 = por %p141, %p142
      %p144 = scmp.le.s32.totalorder 1, %s16
      %p145 = scmp.lt.s32.totalorder %s16, 3
      %p146 = pnand %p144, %p145
      %p147 = pneg %p146
      // Predicated region
      $region9: #{tpu_custom_call.1} parent=5 // pred_check
        _
      $region10: #{tpu_custom_call.1} parent=5 // pred_check_branch
        %149 = sbr.rel (%p146) target = $region12
      $region11: #{tpu_custom_call.1} parent=5 // pred_region
        %s150 = ssub.s32 %s16, 1
        // Predicated region
        $region13: #{tpu_custom_call.1} parent=11 // pred_check
          %p151 = pneg %p82
        $region14: #{tpu_custom_call.1} parent=11 // pred_check_branch
          %153 = sbr.rel (%p151) target = $region16
        $region15: #{tpu_custom_call.1} parent=11 // pred_region
          %s154 = smul.u32 3, %s26
          %s156 = ssub.s32 48, 48
          %157 = vsyncadd [#allocation6], %s156
          %s158 = smul.addr %s154, 16
          %s159 = scalar_lea.hbm %s1, %s158
          %s161 = sshll.u32 [#allocation5], 4
          %s162 = int_to_ptr.vmem [resolvable:$true] %s161
          %164 = dma.hbm_to_vmem [thread:$0]  %s159, 48, %s162, [#allocation6]
        $region16: #{tpu_custom_call.1} parent=11 // pred_fallthru
          _
        // Predicated region
        $region17: #{tpu_custom_call.1} parent=11 // pred_check
          %p165 = pneg %p108
        $region18: #{tpu_custom_call.1} parent=11 // pred_check_branch
          %167 = sbr.rel (%p165) target = $region20
        $region19: #{tpu_custom_call.1} parent=11 // pred_region
          %s168 = smul.u32 3, %s26
          %p169 = scmp.lt.s32.totalorder %s168, 2
          %s170 = scalar_select %p169, %s168, 2
          %s171 = scalar_lea.vmem %s2, %s170
          %s172 = smul.u32 3, %s26
        $region20: #{tpu_custom_call.1} parent=11 // pred_fallthru
          _
      $region12: #{tpu_custom_call.1} parent=5 // pred_fallthru
        _
      %p173 = scmp.lt.s32.totalorder %s16, 2
      // Predicated region
      $region21: #{tpu_custom_call.1} parent=5 // pred_check
        %p174 = pneg %p173
      $region22: #{tpu_custom_call.1} parent=5 // pred_check_branch
        %176 = sbr.rel (%p174) target = $region24
      $region23: #{tpu_custom_call.1} parent=5 // pred_region
        // Predicated region
        $region25: #{tpu_custom_call.1} parent=23 // pred_check
          %p177 = pneg %p50
        $region26: #{tpu_custom_call.1} parent=23 // pred_check_branch
          %179 = sbr.rel (%p177) target = $region28
        $region27: #{tpu_custom_call.1} parent=23 // pred_region
          %s180 = sand.u32 %s40, 1
          %s181 = scalar_lea.sflag [#allocation3], %s180
          %s182 = sand.u32 %s40, 1
          %s183 = smul.addr %s182, 384
          %s184 = scalar_lea.vmem [#allocation2], %s183
          %s185 = smul.u32 16, %s23
          %s186 = smul.u32 3, %s24
          %s188 = ssub.s32 6144, 6144
          %189 = vsyncadd %s181, %s188
          %s190 = smul.addr %s185, 3
          %s191 = sadd.s32 %s186, %s190
          %s192 = smul.addr %s191, 128
          %s193 = scalar_lea.hbm %s0, %s192
          %s194 = sshll.u32 %s184, 4
          %s195 = int_to_ptr.vmem [resolvable:$true] %s194
          %200 = dma.hbm_to_vmem [thread:$0]  %s193, 6144, %s195, %s181, 384, 384, 24
        $region28: #{tpu_custom_call.1} parent=23 // pred_fallthru
          _
      $region24: #{tpu_custom_call.1} parent=5 // pred_fallthru
        _
      %p201 = scmp.le.s32.totalorder 1, %s16
      %p202 = scmp.lt.s32.totalorder %s16, 3
      %p203 = pnand %p201, %p202
      %p204 = pneg %p203
      // Predicated region
      $region29: #{tpu_custom_call.1} parent=5 // pred_check
        _
      $region30: #{tpu_custom_call.1} parent=5 // pred_check_branch
        %206 = sbr.rel (%p203) target = $region32
      $region31: #{tpu_custom_call.1} parent=5 // pred_region
        %s207 = ssub.s32 %s16, 1
        %s208 = sand.u32 %s43, 1
        %s209 = scalar_lea.sflag [#allocation3], %s208
        %s210 = sand.u32 %s43, 1
        %s211 = smul.addr %s210, 384
        %s212 = scalar_lea.vmem [#allocation2], %s211
        // Predicated region
        $region33: #{tpu_custom_call.1} parent=31 // pred_check
          %p213 = pneg %p56
        $region34: #{tpu_custom_call.1} parent=31 // pred_check_branch
          %215 = sbr.rel (%p213) target = $region36
        $region35: #{tpu_custom_call.1} parent=31 // pred_region
          %216 = dma.done %s209, 6144
        $region36: #{tpu_custom_call.1} parent=31 // pred_fallthru
          _
        // Predicated region
        $region37: #{tpu_custom_call.1} parent=31 // pred_check
          %p217 = pneg %p82
        $region38: #{tpu_custom_call.1} parent=31 // pred_check_branch
          %219 = sbr.rel (%p217) target = $region40
        $region39: #{tpu_custom_call.1} parent=31 // pred_region
          %220 = dma.done [#allocation6], 48
        $region40: #{tpu_custom_call.1} parent=31 // pred_fallthru
          _
        %s221 = sand.u32 %s43, 1
        %s222 = scalar_lea.sflag [#allocation3], %s221
        %s223 = sand.u32 %s43, 1
        %s224 = smul.addr %s223, 384
        %s225 = scalar_lea.vmem [#allocation2], %s224
        %p226 = pneg %p56
        %p227 = pneg %p53
        %p228 = pneg %p82
        %p229 = pneg %p79
        %s230 = smul.u32 3, %s26
        %p231 = scmp.lt.s32.totalorder %s230, 2
        %s232 = scalar_select %p231, %s230, 2
        %s233 = scalar_lea.vmem %s2, %s232
        %p234 = pneg %p108
        %p235 = pneg %p105
        %p236 = pneg %p136
        %p237 = pneg %p133
        %s238 = sand.u32 %s123, 1
        %s239 = scalar_lea.sflag [#allocation4], %s238
        %s240 = sand.u32 %s123, 1
        %s241 = smul.addr %s240, 384
        %s242 = scalar_lea.vmem [#allocation7], %s241
        %s243 = smul.u32 16, %s25
        %s244 = smul.u32 3, %s26
        %s245 = smul.u32 3, %s26
        %s246 = smul.u32 3, %s26
        %p247 = scmp.lt.s32.totalorder %s246, 2
        %s248 = scalar_select %p247, %s246, 2
        %s249 = scalar_lea.vmem %s2, %s248
        %s250 = smul.u32 3, %s26
        %s251 = smul.u32 16, %s25
        %s252 = smul.u32 3, %s26
        %v253 = vld [vmem:[%s212] sm:$0xff]
        %v254 = vld [vmem:[%s212 + $0x8] sm:$0xff]
        %v255 = vld [vmem:[%s212 + $0x10] sm:$0xff]
        %v256 = vld [vmem:[%s212 + $0x18] sm:$0xff]
        %v257 = vld [vmem:[%s212 + $0x20] sm:$0xff]
        %v258 = vld [vmem:[%s212 + $0x28] sm:$0xff]
        %v259 = vld [vmem:[%s212 + $0x30] sm:$0xff]
        %v260 = vld [vmem:[%s212 + $0x38] sm:$0xff]
        %v261 = vld [vmem:[%s212 + $0x40] sm:$0xff]
        %v262 = vld [vmem:[%s212 + $0x48] sm:$0xff]
        %v263 = vld [vmem:[%s212 + $0x50] sm:$0xff]
        %v264 = vld [vmem:[%s212 + $0x58] sm:$0xff]
        %v265 = vld [vmem:[%s212 + $0x60] sm:$0xff]
        %v266 = vld [vmem:[%s212 + $0x68] sm:$0xff]
        %v267 = vld [vmem:[%s212 + $0x70] sm:$0xff]
        %v268 = vld [vmem:[%s212 + $0x78] sm:$0xff]
        %v269 = vld [vmem:[%s212 + $0x80] sm:$0xff]
        %v270 = vld [vmem:[%s212 + $0x88] sm:$0xff]
        %v271 = vld [vmem:[%s212 + $0x90] sm:$0xff]
        %v272 = vld [vmem:[%s212 + $0x98] sm:$0xff]
        %v273 = vld [vmem:[%s212 + $0xa0] sm:$0xff]
        %v274 = vld [vmem:[%s212 + $0xa8] sm:$0xff]
        %v275 = vld [vmem:[%s212 + $0xb0] sm:$0xff]
        %v276 = vld [vmem:[%s212 + $0xb8] sm:$0xff]
        %v277 = vld [vmem:[%s212 + $0xc0] sm:$0xff]
        %v278 = vld [vmem:[%s212 + $0xc8] sm:$0xff]
        %v279 = vld [vmem:[%s212 + $0xd0] sm:$0xff]
        %v280 = vld [vmem:[%s212 + $0xd8] sm:$0xff]
        %v281 = vld [vmem:[%s212 + $0xe0] sm:$0xff]
        %v282 = vld [vmem:[%s212 + $0xe8] sm:$0xff]
        %v283 = vld [vmem:[%s212 + $0xf0] sm:$0xff]
        %v284 = vld [vmem:[%s212 + $0xf8] sm:$0xff]
        %v285 = vld [vmem:[%s212 + $0x100] sm:$0xff]
        %v286 = vld [vmem:[%s212 + $0x108] sm:$0xff]
        %v287 = vld [vmem:[%s212 + $0x110] sm:$0xff]
        %v288 = vld [vmem:[%s212 + $0x118] sm:$0xff]
        %v289 = vld [vmem:[%s212 + $0x120] sm:$0xff]
        %v290 = vld [vmem:[%s212 + $0x128] sm:$0xff]
        %v291 = vld [vmem:[%s212 + $0x130] sm:$0xff]
        %v292 = vld [vmem:[%s212 + $0x138] sm:$0xff]
        %v293 = vld [vmem:[%s212 + $0x140] sm:$0xff]
        %v294 = vld [vmem:[%s212 + $0x148] sm:$0xff]
        %v295 = vld [vmem:[%s212 + $0x150] sm:$0xff]
        %v296 = vld [vmem:[%s212 + $0x158] sm:$0xff]
        %v297 = vld [vmem:[%s212 + $0x160] sm:$0xff]
        %v298 = vld [vmem:[%s212 + $0x168] sm:$0xff]
        %v299 = vld [vmem:[%s212 + $0x170] sm:$0xff]
        %v300 = vld [vmem:[%s212 + $0x178] sm:$0xff]
        %v301 = vld [vmem:[#allocation5] sm:$0x7]
        %v303 = vlaneseq
        %v304 = vshrl.u32 %v303, 7
        %v305 = vsub.s32 0, %v304
        %v306 = vrot.slane %v301, %v305
        %v307 = vlaneseq
        %v308 = vshrl.u32 %v307, 7
        %v309 = vsub.s32 1, %v308
        %v310 = vrot.slane %v301, %v309
        %v311 = vlaneseq
        %v312 = vshrl.u32 %v311, 7
        %v313 = vsub.s32 2, %v312
        %v314 = vrot.slane %v301, %v313
        %v318 = vadd.f32 %v253, %v306
        %v319 = vadd.f32 %v254, %v310
        %v320 = vadd.f32 %v255, %v314
        %v321 = vadd.f32 %v256, %v306
        %v322 = vadd.f32 %v257, %v310
        %v323 = vadd.f32 %v258, %v314
        %v324 = vadd.f32 %v259, %v306
        %v325 = vadd.f32 %v260, %v310
        %v326 = vadd.f32 %v261, %v314
        %v327 = vadd.f32 %v262, %v306
        %v328 = vadd.f32 %v263, %v310
        %v329 = vadd.f32 %v264, %v314
        %v330 = vadd.f32 %v265, %v306
        %v331 = vadd.f32 %v266, %v310
        %v332 = vadd.f32 %v267, %v314
        %v333 = vadd.f32 %v268, %v306
        %v334 = vadd.f32 %v269, %v310
        %v335 = vadd.f32 %v270, %v314
        %v336 = vadd.f32 %v271, %v306
        %v337 = vadd.f32 %v272, %v310
        %v338 = vadd.f32 %v273, %v314
        %v339 = vadd.f32 %v274, %v306
        %v340 = vadd.f32 %v275, %v310
        %v341 = vadd.f32 %v276, %v314
        %v342 = vadd.f32 %v277, %v306
        %v343 = vadd.f32 %v278, %v310
        %v344 = vadd.f32 %v279, %v314
        %v345 = vadd.f32 %v280, %v306
        %v346 = vadd.f32 %v281, %v310
        %v347 = vadd.f32 %v282, %v314
        %v348 = vadd.f32 %v283, %v306
        %v349 = vadd.f32 %v284, %v310
        %v350 = vadd.f32 %v285, %v314
        %v351 = vadd.f32 %v286, %v306
        %v352 = vadd.f32 %v287, %v310
        %v353 = vadd.f32 %v288, %v314
        %v354 = vadd.f32 %v289, %v306
        %v355 = vadd.f32 %v290, %v310
        %v356 = vadd.f32 %v291, %v314
        %v357 = vadd.f32 %v292, %v306
        %v358 = vadd.f32 %v293, %v310
        %v359 = vadd.f32 %v294, %v314
        %v360 = vadd.f32 %v295, %v306
        %v361 = vadd.f32 %v296, %v310
        %v362 = vadd.f32 %v297, %v314
        %v363 = vadd.f32 %v298, %v306
        %v364 = vadd.f32 %v299, %v310
        %v365 = vadd.f32 %v300, %v314
        %v366 = vld [vmem:[%s249] sm:$0x7]
        %v368 = vlaneseq
        %v369 = vshrl.u32 %v368, 7
        %v370 = vsub.s32 0, %v369
        %v371 = vrot.slane %v366, %v370
        %v372 = vlaneseq
        %v373 = vshrl.u32 %v372, 7
        %v374 = vsub.s32 1, %v373
        %v375 = vrot.slane %v366, %v374
        %v376 = vlaneseq
        %v377 = vshrl.u32 %v376, 7
        %v378 = vsub.s32 2, %v377
        %v379 = vrot.slane %v366, %v378
        %v383 = vmul.f32 %v318, %v371
        %v384 = vmul.f32 %v319, %v375
        %v385 = vmul.f32 %v320, %v379
        %v386 = vmul.f32 %v321, %v371
        %v387 = vmul.f32 %v322, %v375
        %v388 = vmul.f32 %v323, %v379
        %v389 = vmul.f32 %v324, %v371
        %v390 = vmul.f32 %v325, %v375
        %v391 = vmul.f32 %v326, %v379
        %v392 = vmul.f32 %v327, %v371
        %v393 = vmul.f32 %v328, %v375
        %v394 = vmul.f32 %v329, %v379
        %v395 = vmul.f32 %v330, %v371
        %v396 = vmul.f32 %v331, %v375
        %v397 = vmul.f32 %v332, %v379
        %v398 = vmul.f32 %v333, %v371
        %v399 = vmul.f32 %v334, %v375
        %v400 = vmul.f32 %v335, %v379
        %v401 = vmul.f32 %v336, %v371
        %v402 = vmul.f32 %v337, %v375
        %v403 = vmul.f32 %v338, %v379
        %v404 = vmul.f32 %v339, %v371
        %v405 = vmul.f32 %v340, %v375
        %v406 = vmul.f32 %v341, %v379
        %v407 = vmul.f32 %v342, %v371
        %v408 = vmul.f32 %v343, %v375
        %v409 = vmul.f32 %v344, %v379
        %v410 = vmul.f32 %v345, %v371
        %v411 = vmul.f32 %v346, %v375
        %v412 = vmul.f32 %v347, %v379
        %v413 = vmul.f32 %v348, %v371
        %v414 = vmul.f32 %v349, %v375
        %v415 = vmul.f32 %v350, %v379
        %v416 = vmul.f32 %v351, %v371
        %v417 = vmul.f32 %v352, %v375
        %v418 = vmul.f32 %v353, %v379
        %v419 = vmul.f32 %v354, %v371
        %v420 = vmul.f32 %v355, %v375
        %v421 = vmul.f32 %v356, %v379
        %v422 = vmul.f32 %v357, %v371
        %v423 = vmul.f32 %v358, %v375
        %v424 = vmul.f32 %v359, %v379
        %v425 = vmul.f32 %v360, %v371
        %v426 = vmul.f32 %v361, %v375
        %v427 = vmul.f32 %v362, %v379
        %v428 = vmul.f32 %v363, %v371
        %v429 = vmul.f32 %v364, %v375
        %v430 = vmul.f32 %v365, %v379
        %431 = vst [vmem:[%s242] sm:$0xff] %v383
        %432 = vst [vmem:[%s242 + $0x8] sm:$0xff] %v384
        %433 = vst [vmem:[%s242 + $0x10] sm:$0xff] %v385
        %434 = vst [vmem:[%s242 + $0x18] sm:$0xff] %v386
        %435 = vst [vmem:[%s242 + $0x20] sm:$0xff] %v387
        %436 = vst [vmem:[%s242 + $0x28] sm:$0xff] %v388
        %437 = vst [vmem:[%s242 + $0x30] sm:$0xff] %v389
        %438 = vst [vmem:[%s242 + $0x38] sm:$0xff] %v390
        %439 = vst [vmem:[%s242 + $0x40] sm:$0xff] %v391
        %440 = vst [vmem:[%s242 + $0x48] sm:$0xff] %v392
        %441 = vst [vmem:[%s242 + $0x50] sm:$0xff] %v393
        %442 = vst [vmem:[%s242 + $0x58] sm:$0xff] %v394
        %443 = vst [vmem:[%s242 + $0x60] sm:$0xff] %v395
        %444 = vst [vmem:[%s242 + $0x68] sm:$0xff] %v396
        %445 = vst [vmem:[%s242 + $0x70] sm:$0xff] %v397
        %446 = vst [vmem:[%s242 + $0x78] sm:$0xff] %v398
        %447 = vst [vmem:[%s242 + $0x80] sm:$0xff] %v399
        %448 = vst [vmem:[%s242 + $0x88] sm:$0xff] %v400
        %449 = vst [vmem:[%s242 + $0x90] sm:$0xff] %v401
        %450 = vst [vmem:[%s242 + $0x98] sm:$0xff] %v402
        %451 = vst [vmem:[%s242 + $0xa0] sm:$0xff] %v403
        %452 = vst [vmem:[%s242 + $0xa8] sm:$0xff] %v404
        %453 = vst [vmem:[%s242 + $0xb0] sm:$0xff] %v405
        %454 = vst [vmem:[%s242 + $0xb8] sm:$0xff] %v406
        %455 = vst [vmem:[%s242 + $0xc0] sm:$0xff] %v407
        %456 = vst [vmem:[%s242 + $0xc8] sm:$0xff] %v408
        %457 = vst [vmem:[%s242 + $0xd0] sm:$0xff] %v409
        %458 = vst [vmem:[%s242 + $0xd8] sm:$0xff] %v410
        %459 = vst [vmem:[%s242 + $0xe0] sm:$0xff] %v411
        %460 = vst [vmem:[%s242 + $0xe8] sm:$0xff] %v412
        %461 = vst [vmem:[%s242 + $0xf0] sm:$0xff] %v413
        %462 = vst [vmem:[%s242 + $0xf8] sm:$0xff] %v414
        %463 = vst [vmem:[%s242 + $0x100] sm:$0xff] %v415
        %464 = vst [vmem:[%s242 + $0x108] sm:$0xff] %v416
        %465 = vst [vmem:[%s242 + $0x110] sm:$0xff] %v417
        %466 = vst [vmem:[%s242 + $0x118] sm:$0xff] %v418
        %467 = vst [vmem:[%s242 + $0x120] sm:$0xff] %v419
        %468 = vst [vmem:[%s242 + $0x128] sm:$0xff] %v420
        %469 = vst [vmem:[%s242 + $0x130] sm:$0xff] %v421
        %470 = vst [vmem:[%s242 + $0x138] sm:$0xff] %v422
        %471 = vst [vmem:[%s242 + $0x140] sm:$0xff] %v423
        %472 = vst [vmem:[%s242 + $0x148] sm:$0xff] %v424
        %473 = vst [vmem:[%s242 + $0x150] sm:$0xff] %v425
        %474 = vst [vmem:[%s242 + $0x158] sm:$0xff] %v426
        %475 = vst [vmem:[%s242 + $0x160] sm:$0xff] %v427
        %476 = vst [vmem:[%s242 + $0x168] sm:$0xff] %v428
        %477 = vst [vmem:[%s242 + $0x170] sm:$0xff] %v429
        %478 = vst [vmem:[%s242 + $0x178] sm:$0xff] %v430
        %s479 = sand.u32 %s123, 1
        %s480 = scalar_lea.sflag [#allocation4], %s479
        %s481 = sand.u32 %s123, 1
        %s482 = smul.addr %s481, 384
        %s483 = scalar_lea.vmem [#allocation7], %s482
        // Predicated region
        $region41: #{tpu_custom_call.1} parent=31 // pred_check
          %p484 = pneg %p133
        $region42: #{tpu_custom_call.1} parent=31 // pred_check_branch
          %486 = sbr.rel (%p484) target = $region44
        $region43: #{tpu_custom_call.1} parent=31 // pred_region
          %s487 = smul.u32 16, %s25
          %s488 = smul.u32 3, %s26
          %s490 = ssub.s32 6144, 6144
          %491 = vsyncadd %s480, %s490
          %s492 = smul.addr %s487, 3
          %s493 = sadd.s32 %s488, %s492
          %s494 = smul.addr %s493, 128
          %s495 = scalar_lea.hbm %s3, %s494
          %s496 = sshll.u32 %s483, 4
          %s497 = int_to_ptr.vmem [resolvable:$true] %s496
          %502 = dma.vmem_to_hbm [thread:$0]  %s497, 6144, %s495, %s480, 384, 384, 24
        $region44: #{tpu_custom_call.1} parent=31 // pred_fallthru
          _
      $region32: #{tpu_custom_call.1} parent=5 // pred_fallthru
        _
      %p503 = scmp.le.s32.totalorder 2, %s16
      // Predicated region
      $region45: #{tpu_custom_call.1} parent=5 // pred_check
        %p504 = pneg %p503
      $region46: #{tpu_custom_call.1} parent=5 // pred_check_branch
        %506 = sbr.rel (%p504) target = $region48
      $region47: #{tpu_custom_call.1} parent=5 // pred_region
        %s507 = ssub.s32 %s16, 2
        // Predicated region
        $region49: #{tpu_custom_call.1} parent=47 // pred_check
          %p508 = pneg %p139
        $region50: #{tpu_custom_call.1} parent=47 // pred_check_branch
          %510 = sbr.rel (%p508) target = $region52
        $region51: #{tpu_custom_call.1} parent=47 // pred_region
          %s511 = sand.u32 %s124, 1
          %s512 = scalar_lea.sflag [#allocation4], %s511
          %s513 = sand.u32 %s124, 1
          %s514 = smul.addr %s513, 384
          %s515 = scalar_lea.vmem [#allocation7], %s514
          %516 = dma.done %s512, 6144
        $region52: #{tpu_custom_call.1} parent=47 // pred_fallthru
          _
      $region48: #{tpu_custom_call.1} parent=5 // pred_fallthru
        _
    $region6: #{tpu_custom_call.1} parent=1 // loop_footer
      %s20 = sadd.s32 1, %s16
    $region7: #{tpu_custom_call.1} parent=1 // loop_footer_branch
      %15 = sbr.rel target = $region3
    $region8: #{tpu_custom_call.1} parent=1 // loop_exit
      _
    %517 = vsyncpa [#allocation3], 1
    %s518 = scalar_lea.sflag [#allocation3], 1
    %519 = vsyncpa %s518, 1
    %520 = vsyncpa [#allocation6], 1
    %521 = vsyncpa [#allocation4], 1
    %s522 = scalar_lea.sflag [#allocation4], 1
    %523 = vsyncpa %s522, 1

</llo_original>
